<compile_context>
chip_gen: v7x
topology: tpu7x:2x2x1
jax: 0.10.0
libtpu: 0.0.40
codegen_flags: <defaults>
</compile_context>

<pallas_src>
import functools

import jax
import jax.numpy as jnp
from jax import lax
from jax.experimental import pallas as pl
from jax.experimental.pallas import tpu as pltpu


def _round_up(x, m):
    return ((x + m - 1) // m) * m


def _focal_kernel(preds_ref, labels_ref, out_ref, *, gamma, alpha):
    # preds_ref: (C, tile_n) in the input dtype; labels_ref: (1, tile_n) int32.
    x = preds_ref[...].astype(jnp.float32)                     # (C, tn)

    # Numerically stable log-softmax over the class axis (sublanes).
    m = jnp.max(x, axis=0, keepdims=True)                      # (1, tn)
    shifted = x - m
    lse = jnp.log(jnp.sum(jnp.exp(shifted), axis=0, keepdims=True))
    logsoft = shifted - lse                                    # (C, tn)

    # gather(1, labels) via one-hot masked reduce over the class axis.
    labels = labels_ref[...]                                   # (1, tn) int32
    rows = lax.broadcasted_iota(jnp.int32, x.shape, 0)         # (C, tn)
    onehot = (rows == labels).astype(jnp.float32)
    # Padded / out-of-range labels (-1) never match -> logp = 0 -> loss = 0.
    logp = jnp.sum(logsoft * onehot, axis=0, keepdims=True)    # (1, tn)
    p = jnp.exp(logp)

    one_minus_p = 1.0 - p
    if isinstance(gamma, int) and 0 <= gamma <= 16:
        # Integer exponent: repeated VPU multiplies, no EUP pow().
        focal = jnp.ones_like(one_minus_p) if gamma == 0 else one_minus_p
        for _ in range(int(gamma) - 1):
            focal = focal * one_minus_p
    else:
        focal = jnp.power(one_minus_p, jnp.float32(gamma))

    out_ref[...] = (-alpha) * focal * logp                     # (1, tn) f32


def _pick_tiling(n, c, itemsize):
    """Choose tile_n (examples per grid step) from the per-chip VMEM budget."""
    try:
        vmem_phys = pltpu.get_tpu_info().vmem_capacity_bytes
    except Exception:
        vmem_phys = 64 * 1024 * 1024          # v7x-sized conservative fallback
    # Scoped VMEM limit: leave headroom below physical (v7x: 48 MiB of 64,
    # v5e/v6e: up to ~96-100 MiB of 128).
    vmem_limit = int(min(vmem_phys * 3 // 4, 100 * 1024 * 1024))
    # Per example column: double-buffered preds/labels/output DMA buffers plus
    # ~8 f32 temporaries of height C inside the kernel.
    per_col = 2 * (c * itemsize + 4 + 4) + 8 * c * 4
    budget = vmem_limit // 2                  # keep half the scoped limit free
    tile_n = budget // per_col
    tile_n = min(tile_n, 32768)               # keep per-step vector code sane
    tile_n = max(128, (tile_n // 128) * 128)
    tile_n = min(tile_n, _round_up(n, 128))   # don't over-pad tiny inputs
    return int(tile_n), vmem_limit


def focal_loss(preds, labels, *, gamma=2, alpha=None, reduction="mean",
               tile_n=None):
    """preds: [N, C] float, labels: [N] int. Mirrors FocalLoss.forward."""
    N, C = preds.shape

    if alpha is None:
        alpha_val = 1.0
    elif isinstance(alpha, (int, float)):
        alpha_val = float(alpha)
    else:
        # TODO(synk): per-class alpha (list/tensor indexed by label) not wired
        # into the kernel; pass a scalar or None.
        raise NotImplementedError("per-class alpha not supported")

    itemsize = jnp.dtype(preds.dtype).itemsize
    auto_tile, vmem_limit = _pick_tiling(N, C, itemsize)
    if tile_n is None:
        tile_n = auto_tile
    else:
        tile_n = max(128, _round_up(int(tile_n), 128))

    n_pad = _round_up(N, tile_n)
    preds_p = jnp.pad(preds, ((0, n_pad - N), (0, 0)))
    labels_p = jnp.pad(labels.astype(jnp.int32), (0, n_pad - N),
                       constant_values=-1)

    # Lane-dense layout: class axis -> sublanes, example axis -> lanes.
    preds_t = preds_p.T                       # (C, n_pad), original dtype
    labels_t = labels_p.reshape(1, n_pad)     # (1, n_pad) int32

    kernel = functools.partial(_focal_kernel, gamma=gamma, alpha=alpha_val)
    per_example = pl.pallas_call(
        kernel,
        out_shape=jax.ShapeDtypeStruct((1, n_pad), jnp.float32),
        grid_spec=pltpu.PrefetchScalarGridSpec(
            num_scalar_prefetch=0,
            grid=(n_pad // tile_n,),
            in_specs=[
                pl.BlockSpec((C, tile_n), lambda i: (0, i)),
                pl.BlockSpec((1, tile_n), lambda i: (0, i)),
            ],
            out_specs=pl.BlockSpec((1, tile_n), lambda i: (0, i)),
        ),
        compiler_params=pltpu.CompilerParams(
            dimension_semantics=("parallel",),
            vmem_limit_bytes=vmem_limit,
        ),
    )(preds_t, labels_t)

    total = jnp.sum(per_example)              # padded rows contribute exactly 0
    if reduction == "mean":
        return total / jnp.float32(N)
    return total


def _focal_loss_ref(preds, labels, gamma=2, reduction="mean"):
    logsoft = jax.nn.log_softmax(preds.astype(jnp.float32), axis=1)
    logp = jnp.take_along_axis(logsoft, labels[:, None], axis=1)[:, 0]
    p = jnp.exp(logp)
    loss = -jnp.power(1.0 - p, gamma) * logp
    return loss.mean() if reduction == "mean" else loss.sum()


if __name__ == "__main__":
    key = jax.random.PRNGKey(0)
    k1, k2 = jax.random.split(key)
    N, C = 400, 10                            # ragged N; C not a multiple of 8
    preds = jax.random.normal(k1, (N, C), dtype=jnp.float32)
    labels = jax.random.randint(k2, (N,), 0, C, dtype=jnp.int32)

    ref_mean = _focal_loss_ref(preds, labels, gamma=2, reduction="mean")
    ref_sum = _focal_loss_ref(preds, labels, gamma=2, reduction="sum")

    # Default (VMEM-derived) tiling: single lane-dense tile here.
    out = jax.block_until_ready(focal_loss(preds, labels))
    assert jnp.allclose(out, ref_mean, atol=1e-5, rtol=1e-5), (out, ref_mean)

    # Forced small tile: multi-step "parallel" grid + padded tail tile.
    out_multi = jax.block_until_ready(focal_loss(preds, labels, tile_n=128))
    assert jnp.allclose(out_multi, ref_mean, atol=1e-5, rtol=1e-5), (
        out_multi, ref_mean)

    # 'sum' reduction path.
    out_sum = jax.block_until_ready(focal_loss(preds, labels, reduction="sum"))
    assert jnp.allclose(out_sum, ref_sum, atol=1e-4, rtol=1e-5), (
        out_sum, ref_sum)

    print("KERNEL_OK")
</pallas_src>

<mosaic_0001>
module attributes {stable_mosaic.version = 11 : i64} {
  func.func @_focal_kernel(%arg0: i32, %arg1: memref<10x512xf32, #tpu.memory_space<vmem>>, %arg2: memref<1x512xi32, #tpu.memory_space<vmem>>, %arg3: memref<1x512xf32, #tpu.memory_space<vmem>>) attributes {dimension_semantics = [#tpu.dimension_semantics<parallel>], iteration_bounds = array<i64: 1>, scalar_prefetch = 0 : i64, scratch_operands = 0 : i64, tpu.core_type = #tpu.core_type<tc>, window_params = [{transform_indices = @transform_0, window_bounds = array<i64: 10, 512>}, {transform_indices = @transform_1, window_bounds = array<i64: 1, 512>}, {transform_indices = @transform_2, window_bounds = array<i64: 1, 512>}]} {
    %c0 = arith.constant 0 : index
    %c0_0 = arith.constant 0 : index
    %0 = vector.load %arg1[%c0, %c0_0] : memref<10x512xf32, #tpu.memory_space<vmem>>, vector<10x512xf32>
    %cst = arith.constant dense<0xFF800000> : vector<512xf32>
    %1 = vector.multi_reduction <maximumf>, %0, %cst [0] : vector<10x512xf32> to vector<512xf32>
    %2 = vector.shape_cast %1 : vector<512xf32> to vector<1x512xf32>
    %3 = vector.broadcast %2 : vector<1x512xf32> to vector<10x512xf32>
    %4 = arith.subf %0, %3 : vector<10x512xf32>
    %5 = math.exp %4 : vector<10x512xf32>
    %cst_1 = arith.constant dense<0.000000e+00> : vector<512xf32>
    %6 = vector.multi_reduction <add>, %5, %cst_1 [0] : vector<10x512xf32> to vector<512xf32>
    %7 = vector.shape_cast %6 : vector<512xf32> to vector<1x512xf32>
    %8 = math.log %7 : vector<1x512xf32>
    %9 = vector.broadcast %8 : vector<1x512xf32> to vector<10x512xf32>
    %10 = arith.subf %4, %9 : vector<10x512xf32>
    %c0_2 = arith.constant 0 : index
    %c0_3 = arith.constant 0 : index
    %11 = vector.load %arg2[%c0_2, %c0_3] : memref<1x512xi32, #tpu.memory_space<vmem>>, vector<1x512xi32>
    %12 = tpu.iota {dimensions = array<i32: 0>} : vector<10x512xi32>
    %13 = vector.broadcast %11 : vector<1x512xi32> to vector<10x512xi32>
    %14 = arith.cmpi eq, %12, %13 : vector<10x512xi32>
    %15 = arith.extui %14 : vector<10x512xi1> to vector<10x512xi32>
    %16 = arith.sitofp %15 : vector<10x512xi32> to vector<10x512xf32>
    %17 = arith.mulf %10, %16 : vector<10x512xf32>
    %cst_4 = arith.constant dense<0.000000e+00> : vector<512xf32>
    %18 = vector.multi_reduction <add>, %17, %cst_4 [0] : vector<10x512xf32> to vector<512xf32>
    %19 = vector.shape_cast %18 : vector<512xf32> to vector<1x512xf32>
    %20 = math.exp %19 : vector<1x512xf32>
    %cst_5 = arith.constant 1.000000e+00 : f32
    %21 = vector.broadcast %cst_5 : f32 to vector<1x512xf32>
    %22 = arith.subf %21, %20 : vector<1x512xf32>
    %23 = arith.mulf %22, %22 : vector<1x512xf32>
    %cst_6 = arith.constant -1.000000e+00 : f32
    %24 = vector.broadcast %cst_6 : f32 to vector<1x512xf32>
    %25 = arith.mulf %24, %23 : vector<1x512xf32>
    %26 = arith.mulf %25, %19 : vector<1x512xf32>
    %c0_7 = arith.constant 0 : index
    %c0_8 = arith.constant 0 : index
    %27 = vector.load %arg3[%c0_7, %c0_8] : memref<1x512xf32, #tpu.memory_space<vmem>>, vector<1x512xf32>
    tpu.vector_store %arg3[%c0_7, %c0_8], %26 {strides = array<i32>} : memref<1x512xf32, #tpu.memory_space<vmem>>, vector<1x512xf32>,
    return
  }
  func.func @transform_0(%arg0: i32) -> (i32, i32) {
    %c0_i32 = arith.constant 0 : i32
    %c0_i32_0 = arith.constant 0 : i32
    return %c0_i32, %arg0 : i32, i32
  }
  func.func @transform_1(%arg0: i32) -> (i32, i32) {
    %c0_i32 = arith.constant 0 : i32
    %c0_i32_0 = arith.constant 0 : i32
    return %c0_i32, %arg0 : i32, i32
  }
  func.func @transform_2(%arg0: i32) -> (i32, i32) {
    %c0_i32 = arith.constant 0 : i32
    %c0_i32_0 = arith.constant 0 : i32
    return %c0_i32, %arg0 : i32, i32
  }
}

</mosaic_0001>

<llo_original>
// kernel: tpu_custom_call.1
$region0: #{tpu_custom_call.1}
  #allocation0 [shape = 'u32[]', space=smem, size = 0x4, offset = 0x4, fixed_abs, tag = 'smem constant byte address 0x4 - core index']
  #allocation1 [shape = 'u32[144,128]{1,0:T(1,128)}', space=vmem, size = 0x12000, scoped, tag = 'internal scratch']
  %s0 = inlined_call_operand.hbm [shape: f32[10,512], index: 0, kind: input, shape index: {}]
  %s1 = inlined_call_operand.hbm [shape: s32[1,512], index: 1, kind: input, shape index: {}]
  %s2 = inlined_call_operand.hbm [shape: f32[1,512], index: 2, kind: output, shape index: {}]
  %s3 = sld [smem:[#allocation0]]
  $region26: #{tpu_custom_call.1} parent=0
    _
  %s5 = ssub.s32 1, %s3
  %s6 = scalar_select 0, %s5, %s3
  $region1: #{tpu_custom_call.1} parent=0
    #allocation2 [shape = 'u8[32768]{0}', space=vmem, size = 0x8000, scoped, tag = 'input window, operand 0, single buffered']
    #allocation3 [shape = 's32[1]{0}', space=sflag, size = 0x4, scoped, tag = 'scoped memory for tpu_custom_call.1']
    #allocation4 [shape = 's32[1]{0}', space=sflag, size = 0x4, scoped, tag = 'scoped memory for tpu_custom_call.1']
    #allocation5 [shape = 'u8[2048]{0}', space=vmem, size = 0x800, scoped, tag = 'input window, operand 1, single buffered']
    #allocation6 [shape = 's32[1]{0}', space=sflag, size = 0x4, scoped, tag = 'scoped memory for tpu_custom_call.1']
    #allocation7 [shape = 'u8[2048]{0}', space=vmem, size = 0x800, scoped, tag = 'output window, operand 0, single buffered']
    %7 = vsyncpa [#allocation3], 0
    %8 = vsyncpa [#allocation6], 0
    %9 = vsyncpa [#allocation4], 0
    // Predicated region
    $region2: #{tpu_custom_call.1} parent=1 // pred_check
      _
    $region3: #{tpu_custom_call.1} parent=1 // pred_check_branch
      %11 = sbr.rel (0) target = $region5
    $region4: #{tpu_custom_call.1} parent=1 // pred_region
      %s13 = ssub.s32 1024, 1024
      %14 = vsyncadd [#allocation3], %s13
      %s15 = sshll.u32 [#allocation2], 4
      %s16 = int_to_ptr.vmem [resolvable:$true] %s15
      %21 = dma.hbm_to_vmem [thread:$0]  %s0, 1024, %s16, [#allocation3], 512, 512, 32
    $region5: #{tpu_custom_call.1} parent=1 // pred_fallthru
      _
    // Predicated region
    $region6: #{tpu_custom_call.1} parent=1 // pred_check
      _
    $region7: #{tpu_custom_call.1} parent=1 // pred_check_branch
      %23 = sbr.rel (0) target = $region9
    $region8: #{tpu_custom_call.1} parent=1 // pred_region
      %s25 = ssub.s32 64, 64
      %26 = vsyncadd [#allocation6], %s25
      %s28 = sshll.u32 [#allocation5], 4
      %s29 = int_to_ptr.vmem [resolvable:$true] %s28
      %31 = dma.hbm_to_vmem [thread:$0]  %s1, 64, %s29, [#allocation6]
    $region9: #{tpu_custom_call.1} parent=1 // pred_fallthru
      _
    // Predicated region
    $region10: #{tpu_custom_call.1} parent=1 // pred_check
      _
    $region11: #{tpu_custom_call.1} parent=1 // pred_check_branch
      %33 = sbr.rel (0) target = $region13
    $region12: #{tpu_custom_call.1} parent=1 // pred_region
      %34 = dma.done [#allocation3], 1024
    $region13: #{tpu_custom_call.1} parent=1 // pred_fallthru
      _
    // Predicated region
    $region14: #{tpu_custom_call.1} parent=1 // pred_check
      _
    $region15: #{tpu_custom_call.1} parent=1 // pred_check_branch
      %36 = sbr.rel (0) target = $region17
    $region16: #{tpu_custom_call.1} parent=1 // pred_region
      %37 = dma.done [#allocation6], 64
    $region17: #{tpu_custom_call.1} parent=1 // pred_fallthru
      _
    %v38 = vld [vmem:[#allocation2] sm:$0xff]
    %v39 = vld [vmem:[#allocation2 + $0x8] sm:$0xff]
    %v40 = vld [vmem:[#allocation2 + $0x10] sm:$0xff]
    %v41 = vld [vmem:[#allocation2 + $0x18] sm:$0xff]
    %v42 = vld [vmem:[#allocation2 + $0x20] sm:$0x3]
    %v43 = vld [vmem:[#allocation2 + $0x28] sm:$0x3]
    %v44 = vld [vmem:[#allocation2 + $0x30] sm:$0x3]
    %v45 = vld [vmem:[#allocation2 + $0x38] sm:$0x3]
    %vm46 = vcmask 1041408
    %v47 = vsel %vm46, %v42, -inf
    %v48 = vmax.f32 %v38, %v47
    %v49 = vrot.slane %v48, 4
    %v50 = vmax.f32 %v48, %v49
    %v51 = vrot.slane %v50, 2
    %v52 = vmax.f32 %v50, %v51
    %v53 = vrot.slane %v52, 1
    %v54 = vmax.f32 %v52, %v53
    %v55 = vsel %vm46, %v43, -inf
    %v56 = vmax.f32 %v39, %v55
    %v57 = vrot.slane %v56, 4
    %v58 = vmax.f32 %v56, %v57
    %v59 = vrot.slane %v58, 2
    %v60 = vmax.f32 %v58, %v59
    %v61 = vrot.slane %v60, 1
    %v62 = vmax.f32 %v60, %v61
    %v63 = vsel %vm46, %v44, -inf
    %v64 = vmax.f32 %v40, %v63
    %v65 = vrot.slane %v64, 4
    %v66 = vmax.f32 %v64, %v65
    %v67 = vrot.slane %v66, 2
    %v68 = vmax.f32 %v66, %v67
    %v69 = vrot.slane %v68, 1
    %v70 = vmax.f32 %v68, %v69
    %v71 = vsel %vm46, %v45, -inf
    %v72 = vmax.f32 %v41, %v71
    %v73 = vrot.slane %v72, 4
    %v74 = vmax.f32 %v72, %v73
    %v75 = vrot.slane %v74, 2
    %v76 = vmax.f32 %v74, %v75
    %v77 = vrot.slane %v76, 1
    %v78 = vmax.f32 %v76, %v77
    %v79 = vsub.f32 %v38, %v54
    %v80 = vsub.f32 %v39, %v62
    %v81 = vsub.f32 %v40, %v70
    %v82 = vsub.f32 %v41, %v78
    %v83 = vsub.f32 %v42, %v54
    %v84 = vsub.f32 %v43, %v62
    %v85 = vsub.f32 %v44, %v70
    %v86 = vsub.f32 %v45, %v78
    %v87 = vmul.f32 %v79, 1.442695
    %v88 = vpow.pop %v87
    %v89 = vmul.f32 %v80, 1.442695
    %v90 = vpow.pop %v89
    %v91 = vmul.f32 %v81, 1.442695
    %v92 = vpow.pop %v91
    %v93 = vmul.f32 %v82, 1.442695
    %v94 = vpow.pop %v93
    %v95 = vmul.f32 %v83, 1.442695
    %v96 = vpow.pop %v95
    %v97 = vmul.f32 %v84, 1.442695
    %v98 = vpow.pop %v97
    %v99 = vmul.f32 %v85, 1.442695
    %v100 = vpow.pop %v99
    %v101 = vmul.f32 %v86, 1.442695
    %v102 = vpow.pop %v101
    %v103 = vsel %vm46, %v96, 0.0
    %v104 = vadd.f32 %v88, %v103
    %v105 = vrot.slane %v104, 4
    %v106 = vadd.f32 %v104, %v105
    %v107 = vrot.slane %v106, 2
    %v108 = vadd.f32 %v106, %v107
    %v109 = vrot.slane %v108, 1
    %v110 = vadd.f32 %v108, %v109
    %v111 = vsel %vm46, %v98, 0.0
    %v112 = vadd.f32 %v90, %v111
    %v113 = vrot.slane %v112, 4
    %v114 = vadd.f32 %v112, %v113
    %v115 = vrot.slane %v114, 2
    %v116 = vadd.f32 %v114, %v115
    %v117 = vrot.slane %v116, 1
    %v118 = vadd.f32 %v116, %v117
    %v119 = vsel %vm46, %v100, 0.0
    %v120 = vadd.f32 %v92, %v119
    %v121 = vrot.slane %v120, 4
    %v122 = vadd.f32 %v120, %v121
    %v123 = vrot.slane %v122, 2
    %v124 = vadd.f32 %v122, %v123
    %v125 = vrot.slane %v124, 1
    %v126 = vadd.f32 %v124, %v125
    %v127 = vsel %vm46, %v102, 0.0
    %v128 = vadd.f32 %v94, %v127
    %v129 = vrot.slane %v128, 4
    %v130 = vadd.f32 %v128, %v129
    %v131 = vrot.slane %v130, 2
    %v132 = vadd.f32 %v130, %v131
    %v133 = vrot.slane %v132, 1
    %v134 = vadd.f32 %v132, %v133
    %v135 = vlog2.pop %v110
    %v136 = vmul.f32 %v135, 0.6931472
    %v137 = vlog2.pop %v118
    %v138 = vmul.f32 %v137, 0.6931472
    %v139 = vlog2.pop %v126
    %v140 = vmul.f32 %v139, 0.6931472
    %v141 = vlog2.pop %v134
    %v142 = vmul.f32 %v141, 0.6931472
    %v143 = vsub.f32 %v79, %v136
    %v144 = vsub.f32 %v80, %v138
    %v145 = vsub.f32 %v81, %v140
    %v146 = vsub.f32 %v82, %v142
    %v147 = vsub.f32 %v83, %v136
    %v148 = vsub.f32 %v84, %v138
    %v149 = vsub.f32 %v85, %v140
    %v150 = vsub.f32 %v86, %v142
    %v151 = vld [vmem:[#allocation5] sm:$0xf]
    %v152 = vlaneseq
    %v153 = vshrl.u32 %v152, 7
    %v154 = vadd.s32 %v153, 8
    %v155 = vlaneseq
    %v156 = vshrl.u32 %v155, 7
    %v157 = vsub.s32 0, %v156
    %v158 = vrot.slane %v151, %v157
    %v159 = vlaneseq
    %v160 = vshrl.u32 %v159, 7
    %v161 = vsub.s32 1, %v160
    %v162 = vrot.slane %v151, %v161
    %v163 = vlaneseq
    %v164 = vshrl.u32 %v163, 7
    %v165 = vsub.s32 2, %v164
    %v166 = vrot.slane %v151, %v165
    %v167 = vlaneseq
    %v168 = vshrl.u32 %v167, 7
    %v169 = vsub.s32 3, %v168
    %v170 = vrot.slane %v151, %v169
    %vm171 = vcmp.eq.s32.totalorder %v153, %v158
    %vm172 = vcmp.eq.s32.totalorder %v153, %v162
    %vm173 = vcmp.eq.s32.totalorder %v153, %v166
    %vm174 = vcmp.eq.s32.totalorder %v153, %v170
    %vm175 = vcmp.eq.s32.totalorder %v154, %v158
    %vm176 = vcmp.eq.s32.totalorder %v154, %v162
    %vm177 = vcmp.eq.s32.totalorder %v154, %v166
    %vm178 = vcmp.eq.s32.totalorder %v154, %v170
    %v179 = vsel %vm171, 1, 0
    %v180 = vsel %vm172, 1, 0
    %v181 = vsel %vm173, 1, 0
    %v182 = vsel %vm174, 1, 0
    %v183 = vsel %vm175, 1, 0
    %v184 = vsel %vm176, 1, 0
    %v185 = vsel %vm177, 1, 0
    %v186 = vsel %vm178, 1, 0
    %v187 = vcvt.s32.f32 %v179
    %v188 = vcvt.s32.f32 %v180
    %v189 = vcvt.s32.f32 %v181
    %v190 = vcvt.s32.f32 %v182
    %v191 = vcvt.s32.f32 %v183
    %v192 = vcvt.s32.f32 %v184
    %v193 = vcvt.s32.f32 %v185
    %v194 = vcvt.s32.f32 %v186
    %v195 = vmul.f32 %v143, %v187
    %v196 = vmul.f32 %v144, %v188
    %v197 = vmul.f32 %v145, %v189
    %v198 = vmul.f32 %v146, %v190
    %v199 = vmul.f32 %v147, %v191
    %v200 = vmul.f32 %v148, %v192
    %v201 = vmul.f32 %v149, %v193
    %v202 = vmul.f32 %v150, %v194
    %v203 = vsel %vm46, %v199, 0.0
    %v204 = vadd.f32 %v195, %v203
    %v205 = vrot.slane %v204, 4
    %v206 = vadd.f32 %v204, %v205
    %v207 = vrot.slane %v206, 2
    %v208 = vadd.f32 %v206, %v207
    %v209 = vrot.slane %v208, 1
    %v210 = vadd.f32 %v208, %v209
    %v211 = vsel %vm46, %v200, 0.0
    %v212 = vadd.f32 %v196, %v211
    %v213 = vrot.slane %v212, 4
    %v214 = vadd.f32 %v212, %v213
    %v215 = vrot.slane %v214, 2
    %v216 = vadd.f32 %v214, %v215
    %v217 = vrot.slane %v216, 1
    %v218 = vadd.f32 %v216, %v217
    %v219 = vsel %vm46, %v201, 0.0
    %v220 = vadd.f32 %v197, %v219
    %v221 = vrot.slane %v220, 4
    %v222 = vadd.f32 %v220, %v221
    %v223 = vrot.slane %v222, 2
    %v224 = vadd.f32 %v222, %v223
    %v225 = vrot.slane %v224, 1
    %v226 = vadd.f32 %v224, %v225
    %v227 = vsel %vm46, %v202, 0.0
    %v228 = vadd.f32 %v198, %v227
    %v229 = vrot.slane %v228, 4
    %v230 = vadd.f32 %v228, %v229
    %v231 = vrot.slane %v230, 2
    %v232 = vadd.f32 %v230, %v231
    %v233 = vrot.slane %v232, 1
    %v234 = vadd.f32 %v232, %v233
    %v235 = vmul.f32 %v210, 1.442695
    %v236 = vpow.pop %v235
    %v237 = vmul.f32 %v218, 1.442695
    %v238 = vpow.pop %v237
    %v239 = vmul.f32 %v226, 1.442695
    %v240 = vpow.pop %v239
    %v241 = vmul.f32 %v234, 1.442695
    %v242 = vpow.pop %v241
    %v243 = vsub.f32 1.0, %v236
    %v244 = vsub.f32 1.0, %v238
    %v245 = vsub.f32 1.0, %v240
    %v246 = vsub.f32 1.0, %v242
    %v247 = vmul.f32 %v243, %v243
    %v248 = vmul.f32 %v244, %v244
    %v249 = vmul.f32 %v245, %v245
    %v250 = vmul.f32 %v246, %v246
    %v251 = vmul.f32 %v247, -1.0
    %v252 = vmul.f32 %v248, -1.0
    %v253 = vmul.f32 %v249, -1.0
    %v254 = vmul.f32 %v250, -1.0
    %v255 = vmul.f32 %v251, %v210
    %v256 = vmul.f32 %v252, %v218
    %v257 = vmul.f32 %v253, %v226
    %v258 = vmul.f32 %v254, %v234
    %v263 = vcombine.low %v255, %v256
    %v264 = vcombine.low %v257, %v258
    %v266 = vunpack.c.l.s4 1966171168
    %v267 = vunpack.c.0.s8 %v266
    %v268 = vlaneseq
    %v269 = vshrl.u32 %v268, 7
    %v270 = vsub.s32 %v267, %v269
    %v271 = vrot.slane %v263, %v270
    %v273 = vunpack.c.l.s4 1966171168
    %v274 = vunpack.c.0.s8 %v273
    %v275 = vlaneseq
    %v276 = vshrl.u32 %v275, 7
    %v277 = vsub.s32 %v274, %v276
    %v278 = vrot.slane %v264, %v277
    %v279 = vcombine.low %v271, %v278
    %v281 = vunpack.c.l.s4 1966171168
    %v282 = vunpack.c.0.s8 %v281
    %v283 = vlaneseq
    %v284 = vshrl.u32 %v283, 7
    %v285 = vsub.s32 %v282, %v284
    %v286 = vrot.slane %v279, %v285
    %v288 = vlaneseq
    %vm289 = vcmp.ge.s32.totalorder %v288, 0
    %vm290 = vcmp.lt.s32.totalorder %v288, 512
    %vm291 = vmand %vm289, %vm290
    %292 = vst.msk [vmem:[#allocation7] sm:$0xf] %vm291, %v286
    // Predicated region
    $region18: #{tpu_custom_call.1} parent=1 // pred_check
      _
    $region19: #{tpu_custom_call.1} parent=1 // pred_check_branch
      %294 = sbr.rel (0) target = $region21
    $region20: #{tpu_custom_call.1} parent=1 // pred_region
      %s296 = ssub.s32 64, 64
      %297 = vsyncadd [#allocation4], %s296
      %s299 = sshll.u32 [#allocation7], 4
      %s300 = int_to_ptr.vmem [resolvable:$true] %s299
      %302 = dma.vmem_to_hbm [thread:$0]  %s300, 64, %s2, [#allocation4]
    $region21: #{tpu_custom_call.1} parent=1 // pred_fallthru
      _
    // Predicated region
    $region22: #{tpu_custom_call.1} parent=1 // pred_check
      _
    $region23: #{tpu_custom_call.1} parent=1 // pred_check_branch
      %304 = sbr.rel (0) target = $region25
    $region24: #{tpu_custom_call.1} parent=1 // pred_region
      %305 = dma.done [#allocation4], 64
    $region25: #{tpu_custom_call.1} parent=1 // pred_fallthru
      _
    %306 = vsyncpa [#allocation3], 1
    %307 = vsyncpa [#allocation6], 1
    %308 = vsyncpa [#allocation4], 1

</llo_original>
